<compile_context>
chip_gen: v5e
topology: v5e:2x2
jax: 0.10.0
libtpu: 0.0.40
codegen_flags: <defaults>
</compile_context>

<pallas_src>
import jax
import jax.numpy as jnp
import numpy as np
from jax.experimental import pallas as pl
from jax.experimental.pallas import tpu as pltpu


def class_affine_kernel(wb_ref, arg_ref, x_ref, out_ref, onehot_ref):
    """One (batch, pixel-tile, channel-tile) grid step.

    wb_ref     : VMEM (2*C, L)       fused [weight.T ; bias.T] table, interleaved
                                     per channel tile (resident, fetched once)
    arg_ref    : VMEM (1, 1, HW_T)   int32 per-pixel class id
    x_ref      : VMEM (1, C_T, HW_T)
    out_ref    : VMEM (1, C_T, HW_T)
    onehot_ref : VMEM (L, HW_T) f32  scratch, built once per pixel tile
    """
    j = pl.program_id(2)                       # channel-tile index (innermost)
    L, hw = onehot_ref.shape
    c_tile = out_ref.shape[1]

    # Build the one-hot of the per-pixel class id once per pixel tile; it is
    # reused across all channel tiles (channel grid axis is "arbitrary").
    @pl.when(j == 0)
    def _():
        labels = jax.lax.broadcasted_iota(jnp.int32, (L, hw), 0)
        onehot_ref[...] = (labels == arg_ref[0]).astype(jnp.float32)

    # Single fused MXU matmul: (2*C_T, L) @ (L, HW_T) -> [class_weight; class_bias].
    row0 = pl.multiple_of(j * (2 * c_tile), 2 * c_tile)
    wb = wb_ref[pl.ds(row0, 2 * c_tile), :]
    fused = jnp.dot(wb, onehot_ref[...], preferred_element_type=jnp.float32)
    cw = fused[:c_tile]
    cb = fused[c_tile:]

    x = x_ref[0]
    if x_ref.dtype == jnp.bfloat16:
        # bf16 VALU path (v6e/v7x); still numerically valid (packed ops) on v5e.
        out_ref[0] = x * cw.astype(jnp.bfloat16) + cb.astype(jnp.bfloat16)
    else:
        out_ref[0] = (x.astype(jnp.float32) * cw + cb).astype(out_ref.dtype)


def _vmem_capacity_bytes():
    """Best-effort physical VMEM size; conservative (v7x = 64 MiB) fallback."""
    try:
        info = pltpu.get_tpu_info()
        for attr in ("vmem_capacity_bytes", "vmem_bytes", "vmem_size_bytes"):
            v = getattr(info, attr, None)
            if v:
                return int(v)
    except Exception:
        pass
    return 64 << 20


def _pick_tile(total, target, align):
    """Largest multiple-of-`align` divisor of `total` <= target (clamped to
    [align, total]); None if no aligned divisor exists."""
    target = min(max(target, align), total)
    for t in range(target, align - 1, -1):
        if total % t == 0 and t % align == 0:
            return t
    return None


def _vmem_estimate(c_tile, hw_tile, C, L, itemsize):
    """Honest per-step VMEM bytes: double-buffered DMA blocks + resident fused
    table + one-hot scratch + compute intermediates."""
    io = 2 * 2 * c_tile * hw_tile * itemsize      # x + out blocks, double-buffered
    arg = 2 * hw_tile * 4                         # id block, double-buffered
    table = 2 * 2 * C * L * 4                     # fused [2C, L] f32 table
    onehot = L * hw_tile * 4                      # scratch
    inter = 5 * c_tile * hw_tile * 4              # matmul result + cw/cb/upcast/result
    return io + arg + table + onehot + inter


def class_affine_forward(x, mask, weight, bias, *, c_tile=None, hw_tile=None):
    """ClassAffine forward.  x: [N,C,H,W], mask: [N,L,H,W], weight/bias: [L,C]."""
    N, C, H, W = x.shape
    L = mask.shape[1]
    HW = H * W
    itemsize = jnp.dtype(x.dtype).itemsize

    # torch.argmax(mask, 1) -- done once in the wrapper; the kernel only sees
    # an int32 id per pixel (L x less segmentation HBM traffic).
    arg = jnp.argmax(mask, axis=1).astype(jnp.int32).reshape(N, 1, HW)

    # Lane-dense layout; pad H*W up to a multiple of 128 if needed.
    HW_pad = ((HW + 127) // 128) * 128
    x2 = x.reshape(N, C, HW)
    if HW_pad != HW:
        pad = HW_pad - HW
        x2 = jnp.pad(x2, ((0, 0), (0, 0), (0, pad)))
        arg = jnp.pad(arg, ((0, 0), (0, 0), (0, pad)))   # id 0 is always valid

    # Generation-aware tile targets / VMEM budget.
    vmem_cap = _vmem_capacity_bytes()
    if vmem_cap >= (100 << 20):          # v5e / v6e: 128 MiB VMEM
        hw_target, c_target, vmem_cap_limit = 8192, 512, 96 << 20
    else:                                # v7x: 64 MiB VMEM
        hw_target, c_target, vmem_cap_limit = 2048, 256, 56 << 20
    budget = int(0.75 * vmem_cap)

    # Dtype-aware channel alignment (sublane packing): f32->8, bf16->16, int8->32.
    c_align = {1: 32, 2: 16, 4: 8}.get(itemsize, 8)
    if c_tile is None:
        c_tile = _pick_tile(C, c_target, c_align) or C
    if hw_tile is None:
        hw_tile = _pick_tile(HW_pad, hw_target, 128)
    # Shrink tiles until the honest per-step estimate fits the budget.
    while _vmem_estimate(c_tile, hw_tile, C, L, itemsize) > budget and hw_tile > 128:
        hw_tile = _pick_tile(HW_pad, hw_tile // 2, 128)
    while _vmem_estimate(c_tile, hw_tile, C, L, itemsize) > budget and c_tile > c_align:
        smaller = _pick_tile(C, c_tile // 2, c_align)
        if smaller is None or smaller >= c_tile:
            break
        c_tile = smaller

    n_ct = C // c_tile
    grid = (N, HW_pad // hw_tile, n_ct)

    # Fused affine table [2C, L]: for channel tile j, rows
    # [j*2*c_tile : j*2*c_tile + c_tile] are weight.T rows and the next c_tile
    # rows are bias.T rows, so the kernel pulls one contiguous slab per step.
    w_t = weight.astype(jnp.float32).T        # [C, L]
    b_t = bias.astype(jnp.float32).T          # [C, L]
    wb = jnp.concatenate(
        [w_t.reshape(n_ct, c_tile, L), b_t.reshape(n_ct, c_tile, L)], axis=1
    ).reshape(2 * C, L)

    est = _vmem_estimate(c_tile, hw_tile, C, L, itemsize)
    vmem_limit = int(min(max(est * 3 // 2, 32 << 20), vmem_cap_limit))

    cost = pl.CostEstimate(
        flops=int(N * HW_pad * (4 * C * L + 2 * C + L)),   # fused matmul + affine + one-hot
        transcendentals=0,
        bytes_accessed=int(2 * N * C * HW * itemsize + N * HW * 4 + 2 * C * L * 4),
    )

    out = pl.pallas_call(
        class_affine_kernel,
        out_shape=jax.ShapeDtypeStruct((N, C, HW_pad), x.dtype),
        grid_spec=pltpu.PrefetchScalarGridSpec(
            num_scalar_prefetch=0,
            grid=grid,
            in_specs=[
                pl.BlockSpec((2 * C, L), lambda n, p, j: (0, 0)),               # fused table (resident)
                pl.BlockSpec((1, 1, hw_tile), lambda n, p, j: (n, 0, p)),       # arg ids
                pl.BlockSpec((1, c_tile, hw_tile), lambda n, p, j: (n, j, p)),  # x
            ],
            out_specs=pl.BlockSpec((1, c_tile, hw_tile), lambda n, p, j: (n, j, p)),
            scratch_shapes=[pltpu.VMEM((L, hw_tile), jnp.float32)],             # hoisted one-hot
        ),
        compiler_params=pltpu.CompilerParams(
            # Batch / pixel axes are embarrassingly parallel (megacore-friendly);
            # channel axis is "arbitrary" so the hoisted one-hot scratch stays
            # valid across all channel tiles of a pixel tile.
            dimension_semantics=("parallel", "parallel", "arbitrary"),
            vmem_limit_bytes=vmem_limit,
        ),
        cost_estimate=cost,
    )(wb, arg, x2)

    return out[:, :, :HW].reshape(N, C, H, W)


def class_affine_reference(x, mask, weight, bias):
    """Pure-JAX reference mirroring the PyTorch ClassAffine.forward."""
    arg = jnp.argmax(mask, axis=1)                  # [N, H, W]
    cw = weight[arg].transpose(0, 3, 1, 2)          # [N, C, H, W]
    cb = bias[arg].transpose(0, 3, 1, 2)
    return x * cw + cb


if __name__ == "__main__":
    key = jax.random.PRNGKey(0)
    k_x, k_m, k_w, k_b = jax.random.split(key, 4)

    N, C, H, W = 2, 4, 16, 16     # affine_nc = 4
    L = 4                         # label_nc = 4

    x = jax.random.normal(k_x, (N, C, H, W), dtype=jnp.float32)
    mask = jax.random.uniform(k_m, (N, L, H, W), dtype=jnp.float32)

    # Module init: nn.init.uniform_(weight), nn.init.zeros_(bias).
    # Bias randomized here (same semantics) so the bias path is actually tested.
    weight = jax.random.uniform(k_w, (L, C), dtype=jnp.float32)
    bias = 0.1 * jax.random.normal(k_b, (L, C), dtype=jnp.float32)

    out = class_affine_forward(x, mask, weight, bias)
    out = jax.block_until_ready(out)

    ref = class_affine_reference(x, mask, weight, bias)
    np.testing.assert_allclose(np.asarray(out), np.asarray(ref), rtol=1e-5, atol=1e-5)

    print("KERNEL_OK")
</pallas_src>

<mosaic_0001>
module attributes {stable_mosaic.version = 11 : i64} {
  func.func @class_affine_kernel(%arg0: i32, %arg1: i32, %arg2: i32, %arg3: memref<8x4xf32, #tpu.memory_space<vmem>>, %arg4: memref<1x1x256xi32, #tpu.memory_space<vmem>>, %arg5: memref<1x4x256xf32, #tpu.memory_space<vmem>>, %arg6: memref<1x4x256xf32, #tpu.memory_space<vmem>>, %arg7: memref<4x256xf32, #tpu.memory_space<vmem>>) attributes {dimension_semantics = [#tpu.dimension_semantics<parallel>, #tpu.dimension_semantics<parallel>, #tpu.dimension_semantics<arbitrary>], iteration_bounds = array<i64: 2, 1, 1>, scalar_prefetch = 0 : i64, scratch_operands = 1 : i64, tpu.core_type = #tpu.core_type<tc>, window_params = [{pipeline_mode = #tpu.pipeline_mode<synchronous>, transform_indices = @transform_0, window_bounds = array<i64: 8, 4>}, {transform_indices = @transform_1, window_bounds = array<i64: 1, 1, 256>}, {transform_indices = @transform_2, window_bounds = array<i64: 1, 4, 256>}, {transform_indices = @transform_3, window_bounds = array<i64: 1, 4, 256>}]} {
    %c0_i32 = arith.constant 0 : i32
    %0 = arith.cmpi eq, %arg2, %c0_i32 : i32
    %1 = arith.extui %0 : i1 to i32
    %c0_i32_0 = arith.constant 0 : i32
    %2 = arith.cmpi ne, %1, %c0_i32_0 : i32
    scf.if %2 {
      %18 = tpu.iota {dimensions = array<i32: 0>} : vector<4x256xi32>
      %c0_9 = arith.constant 0 : index
      %c0_10 = arith.constant 0 : index
      %c0_11 = arith.constant 0 : index
      %19 = vector.load %arg4[%c0_9, %c0_10, %c0_11] : memref<1x1x256xi32, #tpu.memory_space<vmem>>, vector<1x1x256xi32>
      %20 = vector.shape_cast %19 : vector<1x1x256xi32> to vector<1x256xi32>
      %21 = vector.broadcast %20 : vector<1x256xi32> to vector<4x256xi32>
      %22 = arith.cmpi eq, %18, %21 : vector<4x256xi32>
      %23 = arith.extui %22 : vector<4x256xi1> to vector<4x256xi32>
      %24 = arith.sitofp %23 : vector<4x256xi32> to vector<4x256xf32>
      %c0_12 = arith.constant 0 : index
      %c0_13 = arith.constant 0 : index
      %25 = vector.load %arg7[%c0_12, %c0_13] : memref<4x256xf32, #tpu.memory_space<vmem>>, vector<4x256xf32>
      tpu.vector_store %arg7[%c0_12, %c0_13], %24 {strides = array<i32>} : memref<4x256xf32, #tpu.memory_space<vmem>>, vector<4x256xf32>,
    } else {
    }
    %c8_i32 = arith.constant 8 : i32
    %3 = arith.muli %arg2, %c8_i32 : i32
    %4 = tpu.assume_multiple %3, 8 : i32
    %5 = arith.index_cast %4 : i32 to index
    %c0 = arith.constant 0 : index
    %6 = vector.load %arg3[%5, %c0] : memref<8x4xf32, #tpu.memory_space<vmem>>, vector<8x4xf32>
    %c0_1 = arith.constant 0 : index
    %c0_2 = arith.constant 0 : index
    %7 = vector.load %arg7[%c0_1, %c0_2] : memref<4x256xf32, #tpu.memory_space<vmem>>, vector<4x256xf32>
    %cst = arith.constant dense<0.000000e+00> : vector<8x256xf32>
    %8 = tpu.matmul %6, %7, %cst {dimension_numbers = #tpu.dot_dimension_numbers<[1], [0], [0], [1], [0, 0, 1, 1], [], []>} : vector<8x4xf32>, vector<4x256xf32>, vector<8x256xf32> -> vector<8x256xf32>
    %9 = vector.extract_strided_slice %8 {offsets = [0, 0], sizes = [4, 256], strides = [1, 1]} : vector<8x256xf32> to vector<4x256xf32>
    %10 = vector.extract_strided_slice %8 {offsets = [4, 0], sizes = [4, 256], strides = [1, 1]} : vector<8x256xf32> to vector<4x256xf32>
    %c0_3 = arith.constant 0 : index
    %c0_4 = arith.constant 0 : index
    %c0_5 = arith.constant 0 : index
    %11 = vector.load %arg5[%c0_3, %c0_4, %c0_5] : memref<1x4x256xf32, #tpu.memory_space<vmem>>, vector<1x4x256xf32>
    %12 = vector.shape_cast %11 : vector<1x4x256xf32> to vector<4x256xf32>
    %13 = arith.mulf %12, %9 : vector<4x256xf32>
    %14 = arith.addf %13, %10 : vector<4x256xf32>
    %c0_6 = arith.constant 0 : index
    %c0_7 = arith.constant 0 : index
    %c0_8 = arith.constant 0 : index
    %15 = vector.load %arg6[%c0_6, %c0_7, %c0_8] : memref<1x4x256xf32, #tpu.memory_space<vmem>>, vector<1x4x256xf32>
    %16 = vector.shape_cast %15 : vector<1x4x256xf32> to vector<4x256xf32>
    %17 = vector.shape_cast %14 : vector<4x256xf32> to vector<1x4x256xf32>
    tpu.vector_store %arg6[%c0_6, %c0_7, %c0_8], %17 {strides = array<i32>} : memref<1x4x256xf32, #tpu.memory_space<vmem>>, vector<1x4x256xf32>,
    return
  }
  func.func @transform_0(%arg0: i32, %arg1: i32, %arg2: i32) -> (i32, i32) {
    %c0_i32 = arith.constant 0 : i32
    %c0_i32_0 = arith.constant 0 : i32
    %c0_i32_1 = arith.constant 0 : i32
    return %c0_i32, %c0_i32_0 : i32, i32
  }
  func.func @transform_1(%arg0: i32, %arg1: i32, %arg2: i32) -> (i32, i32, i32) {
    %c0_i32 = arith.constant 0 : i32
    %c0_i32_0 = arith.constant 0 : i32
    return %arg0, %c0_i32, %arg1 : i32, i32, i32
  }
  func.func @transform_2(%arg0: i32, %arg1: i32, %arg2: i32) -> (i32, i32, i32) {
    %c0_i32 = arith.constant 0 : i32
    return %arg0, %arg2, %arg1 : i32, i32, i32
  }
  func.func @transform_3(%arg0: i32, %arg1: i32, %arg2: i32) -> (i32, i32, i32) {
    %c0_i32 = arith.constant 0 : i32
    return %arg0, %arg2, %arg1 : i32, i32, i32
  }
}

</mosaic_0001>

<llo_original>
// kernel: tpu_custom_call.1
$region0: #{tpu_custom_call.1}
  #allocation0 [shape = 'u32[]', space=smem, size = 0x4, offset = 0x4, fixed_abs, tag = 'smem constant byte address 0x4 - core index']
  #allocation1 [shape = 'u32[72,128]{1,0:T(1,128)}', space=vmem, size = 0x9000, scoped, tag = 'internal scratch']
  #allocation2 [shape = 'f32[4,256]{1,0:T(4,128)}', space=vmem, size = 0x1000, scoped, tag = 'scratch operand']
  %s0 = inlined_call_operand.vmem [shape: f32[8,4], index: 0, kind: input, shape index: {}]
  %s1 = inlined_call_operand.vmem [shape: s32[2,1,256], index: 1, kind: input, shape index: {}]
  %s2 = inlined_call_operand.hbm [shape: f32[2,4,256], index: 2, kind: input, shape index: {}]
  %s3 = inlined_call_operand.hbm [shape: f32[2,4,256], index: 3, kind: output, shape index: {}]
  %s4 = sld [smem:[#allocation0]]
  $region53: #{tpu_custom_call.1} parent=0
    _
  %s6 = ssub.s32 1, %s4
  %s7 = scalar_select 0, %s6, %s4
  $region1: #{tpu_custom_call.1} parent=0
    #allocation3 [shape = 'u8[8192]{0}', space=vmem, size = 0x2000, scoped, tag = 'input window, operand 2']
    #allocation4 [shape = 's32[2]{0}', space=sflag, size = 0x8, scoped, tag = 'scoped memory for tpu_custom_call.1']
    #allocation5 [shape = 's32[2]{0}', space=sflag, size = 0x8, scoped, tag = 'scoped memory for tpu_custom_call.1']
    #allocation6 [shape = 'u8[8192]{0}', space=vmem, size = 0x2000, scoped, tag = 'output window, operand 0']
    %8 = vsyncpa [#allocation4], 0
    %s9 = scalar_lea.sflag [#allocation4], 1
    %10 = vsyncpa %s9, 0
    %11 = vsyncpa [#allocation5], 0
    %s12 = scalar_lea.sflag [#allocation5], 1
    %13 = vsyncpa %s12, 0
    loop: start=0, step=1, limit=4
    $region2: #{tpu_custom_call.1} parent=1 // loop_pre_header
      _
    $region3: #{tpu_custom_call.1} parent=1 // loop_header
      %s15 = sphi 0, %s19
      %p16 = scmp.ge.s32.totalorder %s15, 4
      %s22 = sphi 0, %s41
      %s23 = sphi 0, %s37
      %s24 = sphi 0, %s33
      %s25 = sphi 0, %s22
      %s26 = sphi 0, %s23
      %s27 = sphi 0, %s24
      %s28 = sphi 0, %s25
      %s29 = sphi 0, %s26
      %s30 = sphi 0, %s27
      %s42 = sphi 0, %s42
      %s44 = sphi 0, %s42
      %s45 = sphi 0, %s44
      %s59 = sphi 0, %s45
      %s67 = sphi 0, %s69
      %s70 = sphi 0, %s67
      %s71 = sphi 0, %s70
      %s87 = sphi 0, %s71
      %s97 = sphi 0, %s99
      %s100 = sphi 0, %s97
      %s101 = sphi 0, %s100
      %s117 = sphi 0, %s101
      %s127 = sphi 0, %s129
      %s130 = sphi 0, %s127
      %s131 = sphi 0, %s130
      %s147 = sphi 0, %s131
    $region4: #{tpu_custom_call.1} parent=1 // loop_header_branch
      %18 = sbr.rel (%p16) target = $region8
    $region5: #{tpu_custom_call.1} parent=1 // loop_body
      %s20 = ssub.s32 %s15, 1
      %s21 = ssub.s32 %s15, 2
      %s31 = sadd.s32 1, %s24
      %p32 = scmp.ge.s32.totalorder %s31, 1
      %s33 = scalar_select %p32, 0, %s31
      %s34 = sadd.s32 1, %s23
      %s35 = scalar_select %p32, %s34, %s23
      %p36 = scmp.ge.s32.totalorder %s35, 1
      %s37 = scalar_select %p36, 0, %s35
      %s38 = sadd.s32 1, %s22
      %s39 = scalar_select %p36, %s38, %s22
      %p40 = scmp.ge.s32.totalorder %s39, 2
      %s41 = scalar_select %p40, 0, %s39
      %s43 = sadd.s32 %s42, 1
      %p46 = scmp.eq.s32.totalorder %s15, 1
      %p47 = scmp.ne.s32.totalorder %s42, %s44
      %p48 = scmp.eq.s32.totalorder %s15, 0
      %p49 = por %p47, %p48
      %p50 = scmp.ne.s32.totalorder %s42, %s44
      %p51 = scmp.eq.s32.totalorder %s20, 1
      %p52 = por %p50, %p51
      %p53 = scmp.ne.s32.totalorder %s44, %s45
      %p54 = scmp.eq.s32.totalorder %s20, 0
      %p55 = por %p53, %p54
      %p56 = scmp.ne.s32.totalorder %s44, %s45
      %p57 = scmp.eq.s32.totalorder %s21, 1
      %p58 = por %p56, %p57
      %p60 = scmp.ne.s32.totalorder %s45, %s59
      %p61 = scmp.eq.s32.totalorder %s21, 0
      %p62 = por %p60, %p61
      %s63 = ssub.s32 %s22, %s41
      %s64 = ssub.s32 %s23, %s37
      %s65 = sor.u32 %s63, %s64
      %p66 = scmp.eq.s32.totalorder %s65, 0
      %s68 = sadd.s32 %s67, 1
      %s69 = scalar_select %p66, %s67, %s68
      %p72 = pneg %p66
      %p73 = scmp.eq.s32.totalorder %s15, 1
      %p74 = por %p72, %p73
      %p75 = scmp.ne.s32.totalorder %s67, %s70
      %p76 = scmp.eq.s32.totalorder %s15, 0
      %p77 = por %p75, %p76
      %p78 = scmp.ne.s32.totalorder %s67, %s70
      %p79 = scmp.eq.s32.totalorder %s20, 1
      %p80 = por %p78, %p79
      %p81 = scmp.ne.s32.totalorder %s70, %s71
      %p82 = scmp.eq.s32.totalorder %s20, 0
      %p83 = por %p81, %p82
      %p84 = scmp.ne.s32.totalorder %s70, %s71
      %p85 = scmp.eq.s32.totalorder %s21, 1
      %p86 = por %p84, %p85
      %p88 = scmp.ne.s32.totalorder %s71, %s87
      %p89 = scmp.eq.s32.totalorder %s21, 0
      %p90 = por %p88, %p89
      %s91 = ssub.s32 %s22, %s41
      %s92 = ssub.s32 %s24, %s33
      %s93 = sor.u32 %s91, %s92
      %s94 = ssub.s32 %s23, %s37
      %s95 = sor.u32 %s93, %s94
      %p96 = scmp.eq.s32.totalorder %s95, 0
      %s98 = sadd.s32 %s97, 1
      %s99 = scalar_select %p96, %s97, %s98
      %p102 = pneg %p96
      %p103 = scmp.eq.s32.totalorder %s15, 1
      %p104 = por %p102, %p103
      %p105 = scmp.ne.s32.totalorder %s97, %s100
      %p106 = scmp.eq.s32.totalorder %s15, 0
      %p107 = por %p105, %p106
      %p108 = scmp.ne.s32.totalorder %s97, %s100
      %p109 = scmp.eq.s32.totalorder %s20, 1
      %p110 = por %p108, %p109
      %p111 = scmp.ne.s32.totalorder %s100, %s101
      %p112 = scmp.eq.s32.totalorder %s20, 0
      %p113 = por %p111, %p112
      %p114 = scmp.ne.s32.totalorder %s100, %s101
      %p115 = scmp.eq.s32.totalorder %s21, 1
      %p116 = por %p114, %p115
      %p118 = scmp.ne.s32.totalorder %s101, %s117
      %p119 = scmp.eq.s32.totalorder %s21, 0
      %p120 = por %p118, %p119
      %s121 = ssub.s32 %s22, %s41
      %s122 = ssub.s32 %s24, %s33
      %s123 = sor.u32 %s121, %s122
      %s124 = ssub.s32 %s23, %s37
      %s125 = sor.u32 %s123, %s124
      %p126 = scmp.eq.s32.totalorder %s125, 0
      %s128 = sadd.s32 %s127, 1
      %s129 = scalar_select %p126, %s127, %s128
      %p132 = pneg %p126
      %p133 = scmp.eq.s32.totalorder %s15, 1
      %p134 = por %p132, %p133
      %p135 = scmp.ne.s32.totalorder %s127, %s130
      %p136 = scmp.eq.s32.totalorder %s15, 0
      %p137 = por %p135, %p136
      %p138 = scmp.ne.s32.totalorder %s127, %s130
      %p139 = scmp.eq.s32.totalorder %s20, 1
      %p140 = por %p138, %p139
      %p141 = scmp.ne.s32.totalorder %s130, %s131
      %p142 = scmp.eq.s32.totalorder %s20, 0
      %p143 = por %p141, %p142
      %p144 = scmp.ne.s32.totalorder %s130, %s131
      %p145 = scmp.eq.s32.totalorder %s21, 1
      %p146 = por %p144, %p145
      %p148 = scmp.ne.s32.totalorder %s131, %s147
      %p149 = scmp.eq.s32.totalorder %s21, 0
      %p150 = por %p148, %p149
      %p151 = scmp.le.s32.totalorder 1, %s15
      %p152 = scmp.lt.s32.totalorder %s15, 3
      %p153 = pnand %p151, %p152
      %p154 = pneg %p153
      // Predicated region
      $region9: #{tpu_custom_call.1} parent=5 // pred_check
        _
      $region10: #{tpu_custom_call.1} parent=5 // pred_check_branch
        %156 = sbr.rel (%p153) target = $region12
      $region11: #{tpu_custom_call.1} parent=5 // pred_region
        %s157 = ssub.s32 %s15, 1
        // Predicated region
        $region13: #{tpu_custom_call.1} parent=11 // pred_check
          %p158 = pneg %p55
        $region14: #{tpu_custom_call.1} parent=11 // pred_check_branch
          %160 = sbr.rel (%p158) target = $region16
        $region15: #{tpu_custom_call.1} parent=11 // pred_region
          _
        $region16: #{tpu_custom_call.1} parent=11 // pred_fallthru
          _
      $region12: #{tpu_custom_call.1} parent=5 // pred_fallthru
        _
      %p161 = scmp.lt.s32.totalorder %s15, 2
      // Predicated region
      $region17: #{tpu_custom_call.1} parent=5 // pred_check
        %p162 = pneg %p161
      $region18: #{tpu_custom_call.1} parent=5 // pred_check_branch
        %164 = sbr.rel (%p162) target = $region20
      $region19: #{tpu_custom_call.1} parent=5 // pred_region
        // Predicated region
        $region21: #{tpu_custom_call.1} parent=19 // pred_check
          %p165 = pneg %p77
        $region22: #{tpu_custom_call.1} parent=19 // pred_check_branch
          %167 = sbr.rel (%p165) target = $region24
        $region23: #{tpu_custom_call.1} parent=19 // pred_region
          %s168 = smul.u32 2, %s23
          %p169 = scmp.lt.s32.totalorder %s22, 1
          %s170 = scalar_select %p169, %s22, 1
          %p171 = scmp.lt.s32.totalorder %s168, 1
          %s172 = scalar_select %p171, %s168, 1
          %s173 = smul.addr %s170, 2
          %s174 = sadd.s32 %s172, %s173
          %s175 = scalar_lea.vmem %s1, %s174
          %s176 = smul.u32 2, %s23
        $region24: #{tpu_custom_call.1} parent=19 // pred_fallthru
          _
        // Predicated region
        $region25: #{tpu_custom_call.1} parent=19 // pred_check
          %p177 = pneg %p107
        $region26: #{tpu_custom_call.1} parent=19 // pred_check_branch
          %179 = sbr.rel (%p177) target = $region28
        $region27: #{tpu_custom_call.1} parent=19 // pred_region
          %s180 = sand.u32 %s97, 1
          %s181 = scalar_lea.sflag [#allocation4], %s180
          %s182 = sand.u32 %s97, 1
          %s183 = smul.addr %s182, 8
          %s184 = scalar_lea.vmem [#allocation3], %s183
          %s185 = smul.u32 2, %s23
          %187 = vsyncadd %s181, 0
          %s188 = smul.addr %s24, 2
          %s189 = sadd.s32 %s185, %s188
          %s190 = smul.addr %s22, 2
          %s191 = sadd.s32 %s189, %s190
          %s192 = smul.addr %s191, 4
          %s193 = scalar_lea.hbm %s2, %s192
          %s195 = sshll.u32 %s193, 4
          %s196 = int_to_ptr.hbm [resolvable:$true] %s195
          %s197 = sshll.u32 %s184, 4
          %s198 = int_to_ptr.vmem [resolvable:$true] %s197
          %200 = dma.hbm_to_vmem [thread:$0]  %s196, 128, %s198, %s181
        $region28: #{tpu_custom_call.1} parent=19 // pred_fallthru
          _
      $region20: #{tpu_custom_call.1} parent=5 // pred_fallthru
        _
      %p201 = scmp.le.s32.totalorder 1, %s15
      %p202 = scmp.lt.s32.totalorder %s15, 3
      %p203 = pnand %p201, %p202
      %p204 = pneg %p203
      // Predicated region
      $region29: #{tpu_custom_call.1} parent=5 // pred_check
        _
      $region30: #{tpu_custom_call.1} parent=5 // pred_check_branch
        %206 = sbr.rel (%p203) target = $region32
      $region31: #{tpu_custom_call.1} parent=5 // pred_region
        %s207 = ssub.s32 %s15, 1
        %s208 = sand.u32 %s100, 1
        %s209 = scalar_lea.sflag [#allocation4], %s208
        %s210 = sand.u32 %s100, 1
        %s211 = smul.addr %s210, 8
        %s212 = scalar_lea.vmem [#allocation3], %s211
        // Predicated region
        $region33: #{tpu_custom_call.1} parent=31 // pred_check
          %p213 = pneg %p113
        $region34: #{tpu_custom_call.1} parent=31 // pred_check_branch
          %215 = sbr.rel (%p213) target = $region36
        $region35: #{tpu_custom_call.1} parent=31 // pred_region
          %217 = dma.done %s209, 128
        $region36: #{tpu_custom_call.1} parent=31 // pred_fallthru
          _
        %p218 = pneg %p55
        %p219 = pneg %p52
        %s220 = smul.u32 2, %s26
        %p221 = scmp.lt.s32.totalorder %s25, 1
        %s222 = scalar_select %p221, %s25, 1
        %p223 = scmp.lt.s32.totalorder %s220, 1
        %s224 = scalar_select %p223, %s220, 1
        %s225 = smul.addr %s222, 2
        %s226 = sadd.s32 %s224, %s225
        %s227 = scalar_lea.vmem %s1, %s226
        %p228 = pneg %p83
        %p229 = pneg %p80
        %s230 = sand.u32 %s100, 1
        %s231 = scalar_lea.sflag [#allocation4], %s230
        %s232 = sand.u32 %s100, 1
        %s233 = smul.addr %s232, 8
        %s234 = scalar_lea.vmem [#allocation3], %s233
        %p235 = pneg %p113
        %p236 = pneg %p110
        %p237 = pneg %p143
        %p238 = pneg %p140
        %s239 = sand.u32 %s130, 1
        %s240 = scalar_lea.sflag [#allocation5], %s239
        %s241 = sand.u32 %s130, 1
        %s242 = smul.addr %s241, 8
        %s243 = scalar_lea.vmem [#allocation6], %s242
        %s244 = smul.u32 2, %s26
        %p245 = scmp.lt.s32.totalorder %s25, 1
        %s246 = scalar_select %p245, %s25, 1
        %p247 = scmp.lt.s32.totalorder %s244, 1
        %s248 = scalar_select %p247, %s244, 1
        %s249 = smul.addr %s246, 2
        %s250 = sadd.s32 %s248, %s249
        %s251 = scalar_lea.vmem %s1, %s250
        %s252 = smul.u32 2, %s26
        %s253 = smul.u32 2, %s26
        %s254 = smul.u32 2, %s26
        %p255 = scmp.eq.s32.totalorder %s27, 0
        // Predicated region
        $region37: #{tpu_custom_call.1} parent=31 // pred_check
          %p256 = pneg %p255
        $region38: #{tpu_custom_call.1} parent=31 // pred_check_branch
          %258 = sbr.rel (%p256) target = $region40
        $region39: #{tpu_custom_call.1} parent=31 // pred_region
          %v259 = vlaneseq
          %v260 = vshrl.u32 %v259, 7
          %v261 = vld [vmem:[%s251] sm:$0x3]
          %v262 = vperm.slane %v261, 0
          %v263 = vperm.slane %v261, 1
          %vm264 = vcmp.eq.s32.totalorder %v260, %v262
          %vm265 = vcmp.eq.s32.totalorder %v260, %v263
          %v266 = vsel %vm264, 1, 0
          %v267 = vsel %vm265, 1, 0
          %v268 = vcvt.s32.f32 %v266
          %v269 = vcvt.s32.f32 %v267
          %v272 = vrot.slane %v269, 4
          %vm273 = vcmask 1043456
          %v274 = vsel %vm273, %v268, %v272
          %276 = vst [vmem:[#allocation2] sm:$0xff] %v274
        $region40: #{tpu_custom_call.1} parent=31 // pred_fallthru
          _
        %s277 = smul.u32 %s27, 8
        %s278 = scalar_lea.vmem %s0, %s277
        %v279 = vld [vmem:[%s278] sm:$0xff]
        %v280 = vld [vmem:[#allocation2] sm:$0xff]
        %282 = vst [vmem:[#allocation1] ss:$2 sm:$0xff] %v280
        %v283 = vld.sshfl [vmem:[#allocation1] sm:$0xff pattern:$0x75316420]
        %v284 = vld.sshfl [vmem:[#allocation1 + $0x8] sm:$0xff pattern:$0x75316420]
        %vm285 = vcmask 31744
        %v287 = vsel %vm285, %v279, 0
        %vm289 = vcmask 1043456
        %v290 = vsel %vm289, %v283, 0
        %v292 = vsel %vm289, %v284, 0
        %294 = vmatpush.msra.mxu0 0.0
        %295 = vmatpush.msra.mxu0 0.0
        %296 = vmatpush.msra.mxu0 0.0
        %297 = vmatpush.msra.mxu0 0.0
        %298 = vmatpush.msra.mxu0 0.0
        %299 = vmatpush.msra.mxu0 0.0
        %300 = vmatpush.msra.mxu0 0.0
        %301 = vmatpush.msra.mxu0 0.0
        %302 = vmatpush.msra.mxu0 0.0
        %303 = vmatpush.msra.mxu0 0.0
        %304 = vmatpush.msra.mxu0 0.0
        %305 = vmatpush.msra.mxu0 0.0
        %306 = vmatpush.msra.mxu0 0.0
        %307 = vmatpush.msra.mxu0 0.0
        %308 = vmatpush.msra.mxu0 0.0
        %309 = vmatpush.msra.mxu0 %v290
        %310 = vmatmul.f32.gmra.mxu0 %v287
        %v311 = vpop.f32.mrf.mxu0
        %v312 = vadd.f32 0.0, %v311
        %313 = vdwg.mxu0
        %314 = vmatpush.msra.mxu0 0.0
        %315 = vmatpush.msra.mxu0 0.0
        %316 = vmatpush.msra.mxu0 0.0
        %317 = vmatpush.msra.mxu0 0.0
        %318 = vmatpush.msra.mxu0 0.0
        %319 = vmatpush.msra.mxu0 0.0
        %320 = vmatpush.msra.mxu0 0.0
        %321 = vmatpush.msra.mxu0 0.0
        %322 = vmatpush.msra.mxu0 0.0
        %323 = vmatpush.msra.mxu0 0.0
        %324 = vmatpush.msra.mxu0 0.0
        %325 = vmatpush.msra.mxu0 0.0
        %326 = vmatpush.msra.mxu0 0.0
        %327 = vmatpush.msra.mxu0 0.0
        %328 = vmatpush.msra.mxu0 0.0
        %329 = vmatpush.msra.mxu0 %v292
        %330 = vmatmul.f32.gmra.mxu0 %v287
        %v331 = vpop.f32.mrf.mxu0
        %v332 = vadd.f32 0.0, %v331
        %333 = vdwg.mxu0
        %v334 = vld [vmem:[%s212] sm:$0xff]
        %v337 = vrot.slane %v332, 4
        %v338 = vsel %vm289, %v312, %v337
        %v340 = vmul.f32 %v334, %v338
        %341 = vst.sshfl [vmem:[#allocation1] sm:$0xff pattern:$0x75316420] %v312
        %342 = vst.sshfl [vmem:[#allocation1 + $0x8] sm:$0xff pattern:$0x75316420] %v332
        %s343 = scalar_lea.vmem [#allocation1], 1
        %v344 = vld [vmem:[%s343] ss:$2 sm:$0xff]
        %v346 = vadd.f32 %v340, %v344
        %347 = vst [vmem:[%s243] sm:$0xff] %v346
        %s348 = sand.u32 %s130, 1
        %s349 = scalar_lea.sflag [#allocation5], %s348
        %s350 = sand.u32 %s130, 1
        %s351 = smul.addr %s350, 8
        %s352 = scalar_lea.vmem [#allocation6], %s351
        // Predicated region
        $region41: #{tpu_custom_call.1} parent=31 // pred_check
          %p353 = pneg %p140
        $region42: #{tpu_custom_call.1} parent=31 // pred_check_branch
          %355 = sbr.rel (%p353) target = $region44
        $region43: #{tpu_custom_call.1} parent=31 // pred_region
          %s356 = smul.u32 2, %s26
          %358 = vsyncadd %s349, 0
          %s359 = smul.addr %s27, 2
          %s360 = sadd.s32 %s356, %s359
          %s361 = smul.addr %s25, 2
          %s362 = sadd.s32 %s360, %s361
          %s363 = smul.addr %s362, 4
          %s364 = scalar_lea.hbm %s3, %s363
          %s366 = sshll.u32 %s352, 4
          %s367 = int_to_ptr.vmem [resolvable:$true] %s366
          %s368 = sshll.u32 %s364, 4
          %s369 = int_to_ptr.hbm [resolvable:$true] %s368
          %371 = dma.vmem_to_hbm [thread:$0]  %s367, 128, %s369, %s349
        $region44: #{tpu_custom_call.1} parent=31 // pred_fallthru
          _
      $region32: #{tpu_custom_call.1} parent=5 // pred_fallthru
        _
      %p372 = scmp.le.s32.totalorder 2, %s15
      // Predicated region
      $region45: #{tpu_custom_call.1} parent=5 // pred_check
        %p373 = pneg %p372
      $region46: #{tpu_custom_call.1} parent=5 // pred_check_branch
        %375 = sbr.rel (%p373) target = $region48
      $region47: #{tpu_custom_call.1} parent=5 // pred_region
        %s376 = ssub.s32 %s15, 2
        // Predicated region
        $region49: #{tpu_custom_call.1} parent=47 // pred_check
          %p377 = pneg %p146
        $region50: #{tpu_custom_call.1} parent=47 // pred_check_branch
          %379 = sbr.rel (%p377) target = $region52
        $region51: #{tpu_custom_call.1} parent=47 // pred_region
          %s380 = sand.u32 %s131, 1
          %s381 = scalar_lea.sflag [#allocation5], %s380
          %s382 = sand.u32 %s131, 1
          %s383 = smul.addr %s382, 8
          %s384 = scalar_lea.vmem [#allocation6], %s383
          %386 = dma.done %s381, 128
        $region52: #{tpu_custom_call.1} parent=47 // pred_fallthru
          _
      $region48: #{tpu_custom_call.1} parent=5 // pred_fallthru
        _
    $region6: #{tpu_custom_call.1} parent=1 // loop_footer
      %s19 = sadd.s32 1, %s15
    $region7: #{tpu_custom_call.1} parent=1 // loop_footer_branch
      %14 = sbr.rel target = $region3
    $region8: #{tpu_custom_call.1} parent=1 // loop_exit
      _
    %387 = vsyncpa [#allocation4], 1
    %s388 = scalar_lea.sflag [#allocation4], 1
    %389 = vsyncpa %s388, 1
    %390 = vsyncpa [#allocation5], 1
    %s391 = scalar_lea.sflag [#allocation5], 1
    %392 = vsyncpa %s391, 1

</llo_original>
